<compile_context>
chip_gen: v7x
topology: tpu7x:2x2x1
jax: 0.10.0
libtpu: 0.0.40
codegen_flags: <defaults>
</compile_context>

<pallas_src>
import jax
import jax.numpy as jnp
from jax.experimental import pallas as pl
from jax.experimental.pallas import tpu as pltpu

_LANE = 128
_SUB = 8


# ----------------------------------------------------------------------------
# Kernel: grid = (num_layers,), one full-M dense block per layer
# ----------------------------------------------------------------------------
def _vp_loss_kernel(counts_ref, logits_ref, conf_ref, pos_ref, gpos_ref,
                    bce_out_ref, pos_out_ref):
    """counts_ref : SMEM (2,) int32  [num_valid (gt!=-1), num_pos (gt==1)]
    logits_ref : (1, S, 128)   per-layer confidence logits
    conf_ref   : (S, 128)      ground-truth conf (padding = -1), shared
    pos_ref    : (1, 3, S, 128) per-layer predicted positions, coord-major
    gpos_ref   : (3, S, 128)   ground-truth positions, shared
    outputs    : (1, 1, 128)   lane-dense row holding the broadcast scalar loss
    """
    x = logits_ref[0].astype(jnp.float32)        # (S, 128)
    gt = conf_ref[...].astype(jnp.float32)       # (S, 128)

    valid = gt != -1.0                           # BCE mask (padding excluded)
    sel = gt == 1.0                              # pos-loss mask
    zeros = jnp.zeros_like(x)

    # Numerically stable binary_cross_entropy_with_logits (per element).
    bce = jnp.maximum(x, 0.0) - x * gt + jnp.log(1.0 + jnp.exp(-jnp.abs(x)))

    # F.pairwise_distance(p=2, eps=1e-6): || pred - gt + eps ||_2, computed as
    # explicit per-coordinate squared-diff adds (full-density VPU work).
    p = pos_ref[0].astype(jnp.float32)           # (3, S, 128)
    g = gpos_ref[...].astype(jnp.float32)        # (3, S, 128)
    d = p - g + 1e-6
    dist = jnp.sqrt(d[0] * d[0] + d[1] * d[1] + d[2] * d[2])   # (S, 128)

    # One lane reduce + one sublane reduce per layer.
    b_sum = jnp.sum(jnp.where(valid, bce, zeros), axis=1, keepdims=True)  # (S,1)
    b_sum = jnp.sum(b_sum, axis=0, keepdims=True)                         # (1,1)
    p_sum = jnp.sum(jnp.where(sel, dist, zeros), axis=1, keepdims=True)
    p_sum = jnp.sum(p_sum, axis=0, keepdims=True)

    # Counts are layer-invariant, computed once in the wrapper (raw divisor,
    # matching the reference's empty-mask semantics).
    n_valid = counts_ref[0].astype(jnp.float32)
    n_pos = counts_ref[1].astype(jnp.float32)

    bce_out_ref[...] = jnp.broadcast_to((b_sum / n_valid)[None], bce_out_ref.shape)
    pos_out_ref[...] = jnp.broadcast_to((p_sum / n_pos)[None], pos_out_ref.shape)


# ----------------------------------------------------------------------------
# Wrapper around pallas_call
# ----------------------------------------------------------------------------
def vp_losses_pallas(pred_logits, pred_pos, gt_conf, gt_pos):
    """Fused per-layer losses.

    pred_logits: (L, M)    stacked logits for all decoder layers, M = B*Q
    pred_pos   : (L, M, 3)
    gt_conf    : (M,)      values in {-1, 0, 1}
    gt_pos     : (M, 3)
    returns (loss_bce, loss_pos), each shape (L,) float32
    """
    L, M = pred_logits.shape
    tile = _SUB * _LANE
    m_pad = ((M + tile - 1) // tile) * tile
    pad = m_pad - M
    S = m_pad // _LANE

    # Layer-invariant counts, hoisted out of the kernel (scalar prefetch).
    gt_conf_f = gt_conf.astype(jnp.float32)
    counts = jnp.stack([jnp.sum(gt_conf_f != -1.0),
                        jnp.sum(gt_conf_f == 1.0)]).astype(jnp.int32)

    # Dense (S, 128) layout for M; coord-major positions.  Inputs keep their
    # HBM dtype; padding of gt_conf uses -1 so padded lanes are masked out.
    logits = jnp.pad(pred_logits, ((0, 0), (0, pad))).reshape(L, S, _LANE)
    conf = jnp.pad(gt_conf, ((0, pad),), constant_values=-1).reshape(S, _LANE)
    pos = jnp.pad(jnp.transpose(pred_pos, (0, 2, 1)),
                  ((0, 0), (0, 0), (0, pad))).reshape(L, 3, S, _LANE)
    gpos = jnp.pad(gt_pos.T, ((0, 0), (0, pad))).reshape(3, S, _LANE)

    bce_out, pos_out = pl.pallas_call(
        _vp_loss_kernel,
        out_shape=(jax.ShapeDtypeStruct((L, 1, _LANE), jnp.float32),
                   jax.ShapeDtypeStruct((L, 1, _LANE), jnp.float32)),
        grid_spec=pltpu.PrefetchScalarGridSpec(
            num_scalar_prefetch=1,
            grid=(L,),
            in_specs=[
                pl.BlockSpec((1, S, _LANE), lambda l, counts: (l, 0, 0)),     # logits
                pl.BlockSpec((S, _LANE), lambda l, counts: (0, 0)),           # gt_conf (shared)
                pl.BlockSpec((1, 3, S, _LANE), lambda l, counts: (l, 0, 0, 0)),  # pred_pos
                pl.BlockSpec((3, S, _LANE), lambda l, counts: (0, 0, 0)),     # gt_pos (shared)
            ],
            out_specs=[
                pl.BlockSpec((1, 1, _LANE), lambda l, counts: (l, 0, 0)),
                pl.BlockSpec((1, 1, _LANE), lambda l, counts: (l, 0, 0)),
            ],
        ),
        compiler_params=pltpu.CompilerParams(
            dimension_semantics=("parallel",)),
    )(counts, logits, conf, pos, gpos)

    return bce_out[:, 0, 0], pos_out[:, 0, 0]


# ----------------------------------------------------------------------------
# VpLoss.forward equivalent (single fused kernel launch for all layers)
# ----------------------------------------------------------------------------
def vp_loss_forward(outputs, targets, weight_dict):
    logits_layers = [outputs['pred_logits']]
    pos_layers = [outputs['pred_pos']]
    aux = outputs.get('aux_outputs', [])
    for a in aux:
        logits_layers.append(a['pred_logits'])
        pos_layers.append(a['pred_pos'])

    gt_conf = targets['conf']
    gt_pos = targets['vps']
    B, Q = gt_conf.shape[0], gt_conf.shape[1]
    M = B * Q

    stacked_logits = jnp.stack([l.reshape(M) for l in logits_layers], axis=0)   # (L, M)
    stacked_pos = jnp.stack([p.reshape(M, 3) for p in pos_layers], axis=0)      # (L, M, 3)
    gt_conf_flat = gt_conf.reshape(M)
    gt_pos_flat = gt_pos.reshape(M, 3)

    loss_bce, loss_pos = vp_losses_pallas(stacked_logits, stacked_pos,
                                          gt_conf_flat, gt_pos_flat)

    loss = {}
    if 'loss_orth' in weight_dict:
        # TODO(synk): loss_orth needs PostProcess's data-dependent argsort +
        # greedy candidate selection (dynamic-length output); not translatable.
        pass
    loss['loss_bce'] = loss_bce[0]
    loss['loss_pos'] = loss_pos[0]
    for i in range(len(aux)):
        loss[f'loss_bce_{i}'] = loss_bce[i + 1]
        loss[f'loss_pos_{i}'] = loss_pos[i + 1]
    return loss


# ----------------------------------------------------------------------------
# Pure-JAX reference (mirrors the PyTorch module)
# ----------------------------------------------------------------------------
def _bce_ref(conf, gt_conf):
    valid = gt_conf != -1.0
    per = jnp.maximum(conf, 0.0) - conf * gt_conf + jnp.log(1.0 + jnp.exp(-jnp.abs(conf)))
    return jnp.sum(jnp.where(valid, per, 0.0)) / jnp.sum(valid)


def _pos_ref(pos, gt_pos, gt_conf):
    sel = gt_conf == 1.0
    diff = pos - gt_pos + 1e-6
    d = jnp.sqrt(jnp.sum(diff * diff, axis=-1))
    return jnp.sum(jnp.where(sel, d, 0.0)) / jnp.sum(sel)


def vp_loss_reference(outputs, targets, weight_dict):
    conf = jnp.squeeze(outputs['pred_logits'])
    gt_conf = jnp.squeeze(targets['conf'])
    pos = outputs['pred_pos']
    gt_pos = targets['vps']
    loss = {'loss_bce': _bce_ref(conf, gt_conf),
            'loss_pos': _pos_ref(pos, gt_pos, gt_conf)}
    for i, a in enumerate(outputs.get('aux_outputs', [])):
        loss[f'loss_bce_{i}'] = _bce_ref(jnp.squeeze(a['pred_logits']), gt_conf)
        loss[f'loss_pos_{i}'] = _pos_ref(a['pred_pos'], gt_pos, gt_conf)
    return loss


# ----------------------------------------------------------------------------
# Demo
# ----------------------------------------------------------------------------
if __name__ == "__main__":
    key = jax.random.PRNGKey(0)
    batch, num_queries, num_aux = 2, 64, 2   # M = 128

    k1, k2, k3 = jax.random.split(key, 3)

    # Ground-truth confidence in {-1, 0, 1}; force at least one 1 and one 0.
    gt_conf = jax.random.randint(k1, (batch, num_queries, 1), -1, 2).astype(jnp.float32)
    gt_conf = gt_conf.at[0, 0, 0].set(1.0).at[0, 1, 0].set(0.0)

    gt_pos = jax.random.normal(k2, (batch, num_queries, 3), jnp.float32)
    gt_pos = gt_pos / jnp.linalg.norm(gt_pos, axis=-1, keepdims=True)

    def make_layer(k):
        ka, kb = jax.random.split(k)
        logits = jax.random.normal(ka, (batch, num_queries, 1), jnp.float32)
        p = jax.random.normal(kb, (batch, num_queries, 3), jnp.float32)
        p = p / jnp.linalg.norm(p, axis=-1, keepdims=True)
        return logits, p

    keys = jax.random.split(k3, num_aux + 1)
    main_logits, main_pos = make_layer(keys[0])
    aux_outputs = []
    for i in range(num_aux):
        l, p = make_layer(keys[i + 1])
        aux_outputs.append({'pred_logits': l, 'pred_pos': p})

    outputs = {'pred_logits': main_logits, 'pred_pos': main_pos,
               'aux_outputs': aux_outputs}
    targets = {'conf': gt_conf, 'vps': gt_pos}
    weight_dict = {'loss_bce': 1.0, 'loss_pos': 5.0}   # no 'loss_orth'

    loss = vp_loss_forward(outputs, targets, weight_dict)
    loss = jax.block_until_ready(loss)

    ref = vp_loss_reference(outputs, targets, weight_dict)
    for name in ref:
        assert jnp.allclose(loss[name], ref[name], atol=1e-5, rtol=1e-5), (
            name, loss[name], ref[name])

    print("KERNEL_OK")
</pallas_src>

<mosaic_0001>
module attributes {stable_mosaic.version = 11 : i64} {
  func.func @_vp_loss_kernel(%arg0: i32, %arg1: memref<2xi32, #tpu.memory_space<smem>>, %arg2: memref<1x8x128xf32, #tpu.memory_space<vmem>>, %arg3: memref<8x128xf32, #tpu.memory_space<vmem>>, %arg4: memref<1x3x8x128xf32, #tpu.memory_space<vmem>>, %arg5: memref<3x8x128xf32, #tpu.memory_space<vmem>>, %arg6: memref<1x1x128xf32, #tpu.memory_space<vmem>>, %arg7: memref<1x1x128xf32, #tpu.memory_space<vmem>>) attributes {dimension_semantics = [#tpu.dimension_semantics<parallel>], iteration_bounds = array<i64: 3>, scalar_prefetch = 1 : i64, scratch_operands = 0 : i64, tpu.core_type = #tpu.core_type<tc>, window_params = [{transform_indices = @transform_0, window_bounds = array<i64: 1, 8, 128>}, {pipeline_mode = #tpu.pipeline_mode<synchronous>, transform_indices = @transform_1, window_bounds = array<i64: 8, 128>}, {transform_indices = @transform_2, window_bounds = array<i64: 1, 3, 8, 128>}, {pipeline_mode = #tpu.pipeline_mode<synchronous>, transform_indices = @transform_3, window_bounds = array<i64: 3, 8, 128>}, {transform_indices = @transform_4, window_bounds = array<i64: 1, 1, 128>}, {transform_indices = @transform_5, window_bounds = array<i64: 1, 1, 128>}]} {
    %c0 = arith.constant 0 : index
    %c0_0 = arith.constant 0 : index
    %c0_1 = arith.constant 0 : index
    %0 = vector.load %arg2[%c0, %c0_0, %c0_1] : memref<1x8x128xf32, #tpu.memory_space<vmem>>, vector<1x8x128xf32>
    %1 = vector.shape_cast %0 : vector<1x8x128xf32> to vector<8x128xf32>
    %c0_2 = arith.constant 0 : index
    %c0_3 = arith.constant 0 : index
    %2 = vector.load %arg3[%c0_2, %c0_3] : memref<8x128xf32, #tpu.memory_space<vmem>>, vector<8x128xf32>
    %cst = arith.constant -1.000000e+00 : f32
    %3 = vector.broadcast %cst : f32 to vector<8x128xf32>
    %4 = arith.cmpf one, %2, %3 : vector<8x128xf32>
    %cst_4 = arith.constant 1.000000e+00 : f32
    %5 = vector.broadcast %cst_4 : f32 to vector<8x128xf32>
    %6 = arith.cmpf oeq, %2, %5 : vector<8x128xf32>
    %cst_5 = arith.constant 0.000000e+00 : f32
    %7 = vector.broadcast %cst_5 : f32 to vector<8x128xf32>
    %cst_6 = arith.constant 0.000000e+00 : f32
    %8 = vector.broadcast %cst_6 : f32 to vector<8x128xf32>
    %9 = arith.maximumf %1, %8 : vector<8x128xf32>
    %10 = arith.mulf %1, %2 : vector<8x128xf32>
    %11 = arith.subf %9, %10 : vector<8x128xf32>
    %12 = math.absf %1 : vector<8x128xf32>
    %cst_7 = arith.constant 0.000000e+00 : f32
    %13 = vector.broadcast %cst_7 : f32 to vector<8x128xf32>
    %14 = arith.subf %13, %12 : vector<8x128xf32>
    %15 = math.exp %14 : vector<8x128xf32>
    %cst_8 = arith.constant 1.000000e+00 : f32
    %16 = vector.broadcast %cst_8 : f32 to vector<8x128xf32>
    %17 = arith.addf %16, %15 : vector<8x128xf32>
    %18 = math.log %17 : vector<8x128xf32>
    %19 = arith.addf %11, %18 : vector<8x128xf32>
    %c0_9 = arith.constant 0 : index
    %c0_10 = arith.constant 0 : index
    %c0_11 = arith.constant 0 : index
    %c0_12 = arith.constant 0 : index
    %20 = vector.load %arg4[%c0_9, %c0_10, %c0_11, %c0_12] : memref<1x3x8x128xf32, #tpu.memory_space<vmem>>, vector<1x3x8x128xf32>
    %21 = vector.shape_cast %20 : vector<1x3x8x128xf32> to vector<3x8x128xf32>
    %c0_13 = arith.constant 0 : index
    %c0_14 = arith.constant 0 : index
    %c0_15 = arith.constant 0 : index
    %22 = vector.load %arg5[%c0_13, %c0_14, %c0_15] : memref<3x8x128xf32, #tpu.memory_space<vmem>>, vector<3x8x128xf32>
    %23 = arith.subf %21, %22 : vector<3x8x128xf32>
    %cst_16 = arith.constant 9.99999997E-7 : f32
    %24 = vector.broadcast %cst_16 : f32 to vector<3x8x128xf32>
    %25 = arith.addf %23, %24 : vector<3x8x128xf32>
    %26 = vector.extract_strided_slice %25 {offsets = [0, 0, 0], sizes = [1, 8, 128], strides = [1, 1, 1]} : vector<3x8x128xf32> to vector<1x8x128xf32>
    %27 = vector.shape_cast %26 : vector<1x8x128xf32> to vector<8x128xf32>
    %28 = vector.extract_strided_slice %25 {offsets = [0, 0, 0], sizes = [1, 8, 128], strides = [1, 1, 1]} : vector<3x8x128xf32> to vector<1x8x128xf32>
    %29 = vector.shape_cast %28 : vector<1x8x128xf32> to vector<8x128xf32>
    %30 = arith.mulf %27, %29 : vector<8x128xf32>
    %31 = vector.extract_strided_slice %25 {offsets = [1, 0, 0], sizes = [1, 8, 128], strides = [1, 1, 1]} : vector<3x8x128xf32> to vector<1x8x128xf32>
    %32 = vector.shape_cast %31 : vector<1x8x128xf32> to vector<8x128xf32>
    %33 = vector.extract_strided_slice %25 {offsets = [1, 0, 0], sizes = [1, 8, 128], strides = [1, 1, 1]} : vector<3x8x128xf32> to vector<1x8x128xf32>
    %34 = vector.shape_cast %33 : vector<1x8x128xf32> to vector<8x128xf32>
    %35 = arith.mulf %32, %34 : vector<8x128xf32>
    %36 = arith.addf %30, %35 : vector<8x128xf32>
    %37 = vector.extract_strided_slice %25 {offsets = [2, 0, 0], sizes = [1, 8, 128], strides = [1, 1, 1]} : vector<3x8x128xf32> to vector<1x8x128xf32>
    %38 = vector.shape_cast %37 : vector<1x8x128xf32> to vector<8x128xf32>
    %39 = vector.extract_strided_slice %25 {offsets = [2, 0, 0], sizes = [1, 8, 128], strides = [1, 1, 1]} : vector<3x8x128xf32> to vector<1x8x128xf32>
    %40 = vector.shape_cast %39 : vector<1x8x128xf32> to vector<8x128xf32>
    %41 = arith.mulf %38, %40 : vector<8x128xf32>
    %42 = arith.addf %36, %41 : vector<8x128xf32>
    %43 = math.sqrt %42 : vector<8x128xf32>
    %44 = arith.select %4, %19, %7 : vector<8x128xi1>, vector<8x128xf32>
    %cst_17 = arith.constant dense<0.000000e+00> : vector<8xf32>
    %45 = vector.multi_reduction <add>, %44, %cst_17 [1] : vector<8x128xf32> to vector<8xf32>
    %46 = vector.shape_cast %45 : vector<8xf32> to vector<8x1xf32>
    %cst_18 = arith.constant dense<0.000000e+00> : vector<1xf32>
    %47 = vector.multi_reduction <add>, %46, %cst_18 [0] : vector<8x1xf32> to vector<1xf32>
    %48 = vector.shape_cast %47 : vector<1xf32> to vector<1x1xf32>
    %49 = arith.select %6, %43, %7 : vector<8x128xi1>, vector<8x128xf32>
    %cst_19 = arith.constant dense<0.000000e+00> : vector<8xf32>
    %50 = vector.multi_reduction <add>, %49, %cst_19 [1] : vector<8x128xf32> to vector<8xf32>
    %51 = vector.shape_cast %50 : vector<8xf32> to vector<8x1xf32>
    %cst_20 = arith.constant dense<0.000000e+00> : vector<1xf32>
    %52 = vector.multi_reduction <add>, %51, %cst_20 [0] : vector<8x1xf32> to vector<1xf32>
    %53 = vector.shape_cast %52 : vector<1xf32> to vector<1x1xf32>
    %c0_21 = arith.constant 0 : index
    %54 = memref.load %arg1[%c0_21] : memref<2xi32, #tpu.memory_space<smem>>
    %55 = arith.sitofp %54 : i32 to f32
    %c1 = arith.constant 1 : index
    %56 = memref.load %arg1[%c1] : memref<2xi32, #tpu.memory_space<smem>>
    %57 = arith.sitofp %56 : i32 to f32
    %58 = vector.broadcast %55 : f32 to vector<1x1xf32>
    %59 = arith.divf %48, %58 : vector<1x1xf32>
    %60 = vector.shape_cast %59 : vector<1x1xf32> to vector<1x1x1xf32>
    %61 = vector.shape_cast %60 : vector<1x1x1xf32> to vector<1x1x1xf32>
    %62 = vector.broadcast %61 : vector<1x1x1xf32> to vector<1x1x128xf32>
    %c0_22 = arith.constant 0 : index
    %c0_23 = arith.constant 0 : index
    %c0_24 = arith.constant 0 : index
    %63 = vector.load %arg6[%c0_22, %c0_23, %c0_24] : memref<1x1x128xf32, #tpu.memory_space<vmem>>, vector<1x1x128xf32>
    tpu.vector_store %arg6[%c0_22, %c0_23, %c0_24], %62 {strides = array<i32>} : memref<1x1x128xf32, #tpu.memory_space<vmem>>, vector<1x1x128xf32>,
    %64 = vector.broadcast %57 : f32 to vector<1x1xf32>
    %65 = arith.divf %53, %64 : vector<1x1xf32>
    %66 = vector.shape_cast %65 : vector<1x1xf32> to vector<1x1x1xf32>
    %67 = vector.shape_cast %66 : vector<1x1x1xf32> to vector<1x1x1xf32>
    %68 = vector.broadcast %67 : vector<1x1x1xf32> to vector<1x1x128xf32>
    %c0_25 = arith.constant 0 : index
    %c0_26 = arith.constant 0 : index
    %c0_27 = arith.constant 0 : index
    %69 = vector.load %arg7[%c0_25, %c0_26, %c0_27] : memref<1x1x128xf32, #tpu.memory_space<vmem>>, vector<1x1x128xf32>
    tpu.vector_store %arg7[%c0_25, %c0_26, %c0_27], %68 {strides = array<i32>} : memref<1x1x128xf32, #tpu.memory_space<vmem>>, vector<1x1x128xf32>,
    return
  }
  func.func @transform_0(%arg0: i32, %arg1: memref<2xi32, #tpu.memory_space<smem>>) -> (i32, i32, i32) {
    %c0_i32 = arith.constant 0 : i32
    %c0_i32_0 = arith.constant 0 : i32
    %c0_i32_1 = arith.constant 0 : i32
    return %arg0, %c0_i32, %c0_i32_0 : i32, i32, i32
  }
  func.func @transform_1(%arg0: i32, %arg1: memref<2xi32, #tpu.memory_space<smem>>) -> (i32, i32) {
    %c0_i32 = arith.constant 0 : i32
    %c0_i32_0 = arith.constant 0 : i32
    %c0_i32_1 = arith.constant 0 : i32
    return %c0_i32, %c0_i32_0 : i32, i32
  }
  func.func @transform_2(%arg0: i32, %arg1: memref<2xi32, #tpu.memory_space<smem>>) -> (i32, i32, i32, i32) {
    %c0_i32 = arith.constant 0 : i32
    %c0_i32_0 = arith.constant 0 : i32
    %c0_i32_1 = arith.constant 0 : i32
    %c0_i32_2 = arith.constant 0 : i32
    return %arg0, %c0_i32, %c0_i32_0, %c0_i32_1 : i32, i32, i32, i32
  }
  func.func @transform_3(%arg0: i32, %arg1: memref<2xi32, #tpu.memory_space<smem>>) -> (i32, i32, i32) {
    %c0_i32 = arith.constant 0 : i32
    %c0_i32_0 = arith.constant 0 : i32
    %c0_i32_1 = arith.constant 0 : i32
    %c0_i32_2 = arith.constant 0 : i32
    return %c0_i32, %c0_i32_0, %c0_i32_1 : i32, i32, i32
  }
  func.func @transform_4(%arg0: i32, %arg1: memref<2xi32, #tpu.memory_space<smem>>) -> (i32, i32, i32) {
    %c0_i32 = arith.constant 0 : i32
    %c0_i32_0 = arith.constant 0 : i32
    %c0_i32_1 = arith.constant 0 : i32
    return %arg0, %c0_i32, %c0_i32_0 : i32, i32, i32
  }
  func.func @transform_5(%arg0: i32, %arg1: memref<2xi32, #tpu.memory_space<smem>>) -> (i32, i32, i32) {
    %c0_i32 = arith.constant 0 : i32
    %c0_i32_0 = arith.constant 0 : i32
    %c0_i32_1 = arith.constant 0 : i32
    return %arg0, %c0_i32, %c0_i32_0 : i32, i32, i32
  }
}

</mosaic_0001>

<llo_original>
// kernel: tpu_custom_call.1
$region0: #{tpu_custom_call.1}
  #allocation0 [shape = 'u32[]', space=smem, size = 0x4, offset = 0x4, fixed_abs, tag = 'smem constant byte address 0x4 - core index']
  #allocation1 [shape = 'u32[144,128]{1,0:T(1,128)}', space=vmem, size = 0x12000, scoped, tag = 'internal scratch']
  #allocation2 [shape = 's32[1]{0}', space=sflag, size = 0x4, scoped, tag = 'scoped memory for tpu_custom_call.1']
  #allocation3 [shape = 'u8[512]{0}', space=smem, size = 0x200, scoped, tag = 'prefetched SMEM operand 0']
  %s0 = inlined_call_operand.hbm [shape: s32[2], index: 0, kind: input, shape index: {}]
  %s1 = inlined_call_operand.hbm [shape: f32[3,8,128], index: 1, kind: input, shape index: {}]
  %s2 = inlined_call_operand.hbm [shape: f32[8,128], index: 2, kind: input, shape index: {}]
  %s3 = inlined_call_operand.hbm [shape: f32[3,3,8,128], index: 3, kind: input, shape index: {}]
  %s4 = inlined_call_operand.hbm [shape: f32[3,8,128], index: 4, kind: input, shape index: {}]
  %s5 = inlined_call_operand.hbm [shape: f32[3,1,128], index: 5, kind: output, shape index: {0}]
  %s6 = inlined_call_operand.hbm [shape: f32[3,1,128], index: 6, kind: output, shape index: {1}]
  %7 = xla_tuple %s5, %s6
  %s8 = sld [smem:[#allocation0]]
  $region73: #{tpu_custom_call.1} parent=0
    _
  %s10 = ssub.s32 1, %s8
  %s11 = scalar_select 0, %s10, %s8
  %13 = dma.hbm_to_smem %s0, 16, [#allocation3], [#allocation2]
  %14 = dma.done [#allocation2], 16
  %15 = sfence
  $region1: #{tpu_custom_call.1} parent=0
    #allocation4 [shape = 'u8[8192]{0}', space=vmem, size = 0x2000, scoped, tag = 'input window, operand 1']
    #allocation5 [shape = 's32[2]{0}', space=sflag, size = 0x8, scoped, tag = 'scoped memory for tpu_custom_call.1']
    #allocation6 [shape = 's32[2]{0}', space=sflag, size = 0x8, scoped, tag = 'scoped memory for tpu_custom_call.1']
    #allocation7 [shape = 'u8[4096]{0}', space=vmem, size = 0x1000, scoped, tag = 'input window, operand 2, single buffered']
    #allocation8 [shape = 's32[1]{0}', space=sflag, size = 0x4, scoped, tag = 'scoped memory for tpu_custom_call.1']
    #allocation9 [shape = 'u8[24576]{0}', space=vmem, size = 0x6000, scoped, tag = 'input window, operand 3']
    #allocation10 [shape = 'u8[12288]{0}', space=vmem, size = 0x3000, scoped, tag = 'input window, operand 4, single buffered']
    #allocation11 [shape = 'u8[1024]{0}', space=vmem, size = 0x400, scoped, tag = 'output window, operand 0']
    #allocation12 [shape = 'u8[1024]{0}', space=vmem, size = 0x400, scoped, tag = 'output window, operand 1']
    #allocation13 [shape = 's32[2]{0}', space=sflag, size = 0x8, scoped, tag = 'scoped memory for tpu_custom_call.1']
    %16 = vsyncpa [#allocation5], 0
    %s17 = scalar_lea.sflag [#allocation5], 1
    %18 = vsyncpa %s17, 0
    %19 = vsyncpa [#allocation8], 0
    %20 = vsyncpa [#allocation6], 0
    %s21 = scalar_lea.sflag [#allocation6], 1
    %22 = vsyncpa %s21, 0
    %23 = vsyncpa [#allocation13], 0
    %s24 = scalar_lea.sflag [#allocation13], 1
    %25 = vsyncpa %s24, 0
    loop: start=0, step=1, limit=5
    $region2: #{tpu_custom_call.1} parent=1 // loop_pre_header
      _
    $region3: #{tpu_custom_call.1} parent=1 // loop_header
      %s27 = sphi 0, %s31
      %p28 = scmp.ge.s32.totalorder %s27, 5
      %s37 = sphi 0, %s39
      %s40 = sphi 0, %s37
      %s41 = sphi 0, %s40
      %s57 = sphi 0, %s41
      %s61 = sphi 0, %s61
      %s63 = sphi 0, %s61
      %s64 = sphi 0, %s63
      %s78 = sphi 0, %s64
      %s84 = sphi 0, %s86
      %s87 = sphi 0, %s84
      %s88 = sphi 0, %s87
      %s104 = sphi 0, %s88
      %s108 = sphi 0, %s108
      %s110 = sphi 0, %s108
      %s111 = sphi 0, %s110
      %s125 = sphi 0, %s111
      %s131 = sphi 0, %s133
      %s134 = sphi 0, %s131
      %s135 = sphi 0, %s134
      %s151 = sphi 0, %s135
      %s157 = sphi 0, %s159
      %s160 = sphi 0, %s157
      %s161 = sphi 0, %s160
      %s177 = sphi 0, %s161
    $region4: #{tpu_custom_call.1} parent=1 // loop_header_branch
      %30 = sbr.rel (%p28) target = $region8
    $region5: #{tpu_custom_call.1} parent=1 // loop_body
      %s32 = ssub.s32 %s27, 1
      %s33 = ssub.s32 %s27, 2
      %s34 = sadd.s32 %s27, 1
      %s35 = ssub.s32 %s27, %s34
      %p36 = scmp.eq.s32.totalorder %s35, 0
      %s38 = sadd.s32 %s37, 1
      %s39 = scalar_select %p36, %s37, %s38
      %p42 = pneg %p36
      %p43 = scmp.eq.s32.totalorder %s27, 2
      %p44 = por %p42, %p43
      %p45 = scmp.ne.s32.totalorder %s37, %s40
      %p46 = scmp.eq.s32.totalorder %s27, 0
      %p47 = por %p45, %p46
      %p48 = scmp.ne.s32.totalorder %s37, %s40
      %p49 = scmp.eq.s32.totalorder %s32, 2
      %p50 = por %p48, %p49
      %p51 = scmp.ne.s32.totalorder %s40, %s41
      %p52 = scmp.eq.s32.totalorder %s32, 0
      %p53 = por %p51, %p52
      %p54 = scmp.ne.s32.totalorder %s40, %s41
      %p55 = scmp.eq.s32.totalorder %s33, 2
      %p56 = por %p54, %p55
      %p58 = scmp.ne.s32.totalorder %s41, %s57
      %p59 = scmp.eq.s32.totalorder %s33, 0
      %p60 = por %p58, %p59
      %s62 = sadd.s32 %s61, 1
      %p65 = scmp.eq.s32.totalorder %s27, 2
      %p66 = scmp.ne.s32.totalorder %s61, %s63
      %p67 = scmp.eq.s32.totalorder %s27, 0
      %p68 = por %p66, %p67
      %p69 = scmp.ne.s32.totalorder %s61, %s63
      %p70 = scmp.eq.s32.totalorder %s32, 2
      %p71 = por %p69, %p70
      %p72 = scmp.ne.s32.totalorder %s63, %s64
      %p73 = scmp.eq.s32.totalorder %s32, 0
      %p74 = por %p72, %p73
      %p75 = scmp.ne.s32.totalorder %s63, %s64
      %p76 = scmp.eq.s32.totalorder %s33, 2
      %p77 = por %p75, %p76
      %p79 = scmp.ne.s32.totalorder %s64, %s78
      %p80 = scmp.eq.s32.totalorder %s33, 0
      %p81 = por %p79, %p80
      %s82 = ssub.s32 %s27, %s34
      %p83 = scmp.eq.s32.totalorder %s82, 0
      %s85 = sadd.s32 %s84, 1
      %s86 = scalar_select %p83, %s84, %s85
      %p89 = pneg %p83
      %p90 = scmp.eq.s32.totalorder %s27, 2
      %p91 = por %p89, %p90
      %p92 = scmp.ne.s32.totalorder %s84, %s87
      %p93 = scmp.eq.s32.totalorder %s27, 0
      %p94 = por %p92, %p93
      %p95 = scmp.ne.s32.totalorder %s84, %s87
      %p96 = scmp.eq.s32.totalorder %s32, 2
      %p97 = por %p95, %p96
      %p98 = scmp.ne.s32.totalorder %s87, %s88
      %p99 = scmp.eq.s32.totalorder %s32, 0
      %p100 = por %p98, %p99
      %p101 = scmp.ne.s32.totalorder %s87, %s88
      %p102 = scmp.eq.s32.totalorder %s33, 2
      %p103 = por %p101, %p102
      %p105 = scmp.ne.s32.totalorder %s88, %s104
      %p106 = scmp.eq.s32.totalorder %s33, 0
      %p107 = por %p105, %p106
      %s109 = sadd.s32 %s108, 1
      %p112 = scmp.eq.s32.totalorder %s27, 2
      %p113 = scmp.ne.s32.totalorder %s108, %s110
      %p114 = scmp.eq.s32.totalorder %s27, 0
      %p115 = por %p113, %p114
      %p116 = scmp.ne.s32.totalorder %s108, %s110
      %p117 = scmp.eq.s32.totalorder %s32, 2
      %p118 = por %p116, %p117
      %p119 = scmp.ne.s32.totalorder %s110, %s111
      %p120 = scmp.eq.s32.totalorder %s32, 0
      %p121 = por %p119, %p120
      %p122 = scmp.ne.s32.totalorder %s110, %s111
      %p123 = scmp.eq.s32.totalorder %s33, 2
      %p124 = por %p122, %p123
      %p126 = scmp.ne.s32.totalorder %s111, %s125
      %p127 = scmp.eq.s32.totalorder %s33, 0
      %p128 = por %p126, %p127
      %s129 = ssub.s32 %s27, %s34
      %p130 = scmp.eq.s32.totalorder %s129, 0
      %s132 = sadd.s32 %s131, 1
      %s133 = scalar_select %p130, %s131, %s132
      %p136 = pneg %p130
      %p137 = scmp.eq.s32.totalorder %s27, 2
      %p138 = por %p136, %p137
      %p139 = scmp.ne.s32.totalorder %s131, %s134
      %p140 = scmp.eq.s32.totalorder %s27, 0
      %p141 = por %p139, %p140
      %p142 = scmp.ne.s32.totalorder %s131, %s134
      %p143 = scmp.eq.s32.totalorder %s32, 2
      %p144 = por %p142, %p143
      %p145 = scmp.ne.s32.totalorder %s134, %s135
      %p146 = scmp.eq.s32.totalorder %s32, 0
      %p147 = por %p145, %p146
      %p148 = scmp.ne.s32.totalorder %s134, %s135
      %p149 = scmp.eq.s32.totalorder %s33, 2
      %p150 = por %p148, %p149
      %p152 = scmp.ne.s32.totalorder %s135, %s151
      %p153 = scmp.eq.s32.totalorder %s33, 0
      %p154 = por %p152, %p153
      %s155 = ssub.s32 %s27, %s34
      %p156 = scmp.eq.s32.totalorder %s155, 0
      %s158 = sadd.s32 %s157, 1
      %s159 = scalar_select %p156, %s157, %s158
      %p162 = pneg %p156
      %p163 = scmp.eq.s32.totalorder %s27, 2
      %p164 = por %p162, %p163
      %p165 = scmp.ne.s32.totalorder %s157, %s160
      %p166 = scmp.eq.s32.totalorder %s27, 0
      %p167 = por %p165, %p166
      %p168 = scmp.ne.s32.totalorder %s157, %s160
      %p169 = scmp.eq.s32.totalorder %s32, 2
      %p170 = por %p168, %p169
      %p171 = scmp.ne.s32.totalorder %s160, %s161
      %p172 = scmp.eq.s32.totalorder %s32, 0
      %p173 = por %p171, %p172
      %p174 = scmp.ne.s32.totalorder %s160, %s161
      %p175 = scmp.eq.s32.totalorder %s33, 2
      %p176 = por %p174, %p175
      %p178 = scmp.ne.s32.totalorder %s161, %s177
      %p179 = scmp.eq.s32.totalorder %s33, 0
      %p180 = por %p178, %p179
      %p181 = scmp.le.s32.totalorder 1, %s27
      %p182 = scmp.lt.s32.totalorder %s27, 4
      %p183 = pnand %p181, %p182
      %p184 = pneg %p183
      // Predicated region
      $region9: #{tpu_custom_call.1} parent=5 // pred_check
        _
      $region10: #{tpu_custom_call.1} parent=5 // pred_check_branch
        %186 = sbr.rel (%p183) target = $region12
      $region11: #{tpu_custom_call.1} parent=5 // pred_region
        %s187 = ssub.s32 %s27, 1
        // Predicated region
        $region13: #{tpu_custom_call.1} parent=11 // pred_check
          %p188 = pneg %p74
        $region14: #{tpu_custom_call.1} parent=11 // pred_check_branch
          %190 = sbr.rel (%p188) target = $region16
        $region15: #{tpu_custom_call.1} parent=11 // pred_region
          %s192 = ssub.s32 128, 128
          %193 = vsyncadd [#allocation8], %s192
          %s195 = sshll.u32 [#allocation7], 4
          %s196 = int_to_ptr.vmem [resolvable:$true] %s195
          %198 = dma.hbm_to_vmem [thread:$0]  %s2, 128, %s196, [#allocation8]
        $region16: #{tpu_custom_call.1} parent=11 // pred_fallthru
          _
        // Predicated region
        $region17: #{tpu_custom_call.1} parent=11 // pred_check
          %p199 = pneg %p121
        $region18: #{tpu_custom_call.1} parent=11 // pred_check_branch
          %201 = sbr.rel (%p199) target = $region20
        $region19: #{tpu_custom_call.1} parent=11 // pred_region
          %s203 = ssub.s32 384, 384
          %204 = vsyncadd [#allocation8], %s203
          %s205 = sshll.u32 [#allocation10], 4
          %s206 = int_to_ptr.vmem [resolvable:$true] %s205
          %211 = dma.hbm_to_vmem [thread:$0]  %s4, 384, %s206, [#allocation8], 128, 128, 8
        $region20: #{tpu_custom_call.1} parent=11 // pred_fallthru
          _
      $region12: #{tpu_custom_call.1} parent=5 // pred_fallthru
        _
      %p212 = scmp.lt.s32.totalorder %s27, 3
      // Predicated region
      $region21: #{tpu_custom_call.1} parent=5 // pred_check
        %p213 = pneg %p212
      $region22: #{tpu_custom_call.1} parent=5 // pred_check_branch
        %215 = sbr.rel (%p213) target = $region24
      $region23: #{tpu_custom_call.1} parent=5 // pred_region
        // Predicated region
        $region25: #{tpu_custom_call.1} parent=23 // pred_check
          %p216 = pneg %p47
        $region26: #{tpu_custom_call.1} parent=23 // pred_check_branch
          %218 = sbr.rel (%p216) target = $region28
        $region27: #{tpu_custom_call.1} parent=23 // pred_region
          %s219 = sand.u32 %s27, 1
          %s220 = scalar_lea.sflag [#allocation5], %s219
          %s221 = sand.u32 %s37, 1
          %s222 = smul.addr %s221, 8
          %s223 = scalar_lea.vmem [#allocation4], %s222
          %s225 = ssub.s32 128, 128
          %226 = vsyncadd %s220, %s225
          %s227 = smul.addr %s27, 128
          %s228 = scalar_lea.hbm %s1, %s227
          %s230 = sshll.u32 %s223, 4
          %s231 = int_to_ptr.vmem [resolvable:$true] %s230
          %233 = dma.hbm_to_vmem [thread:$0]  %s228, 128, %s231, %s220
        $region28: #{tpu_custom_call.1} parent=23 // pred_fallthru
          _
        // Predicated region
        $region29: #{tpu_custom_call.1} parent=23 // pred_check
          %p234 = pneg %p94
        $region30: #{tpu_custom_call.1} parent=23 // pred_check_branch
          %236 = sbr.rel (%p234) target = $region32
        $region31: #{tpu_custom_call.1} parent=23 // pred_region
          %s237 = sand.u32 %s27, 1
          %s238 = scalar_lea.sflag [#allocation5], %s237
          %s239 = sand.u32 %s84, 1
          %s240 = smul.addr %s239, 24
          %s241 = scalar_lea.vmem [#allocation9], %s240
          %s243 = ssub.s32 384, 384
          %244 = vsyncadd %s238, %s243
          %s245 = smul.addr %s27, 3
          %s246 = smul.addr %s245, 128
          %s247 = scalar_lea.hbm %s3, %s246
          %s248 = sshll.u32 %s241, 4
          %s249 = int_to_ptr.vmem [resolvable:$true] %s248
          %254 = dma.hbm_to_vmem [thread:$0]  %s247, 384, %s249, %s238, 128, 128, 8
        $region32: #{tpu_custom_call.1} parent=23 // pred_fallthru
          _
      $region24: #{tpu_custom_call.1} parent=5 // pred_fallthru
        _
      %p255 = scmp.le.s32.totalorder 1, %s27
      %p256 = scmp.lt.s32.totalorder %s27, 4
      %p257 = pnand %p255, %p256
      %p258 = pneg %p257
      // Predicated region
      $region33: #{tpu_custom_call.1} parent=5 // pred_check
        _
      $region34: #{tpu_custom_call.1} parent=5 // pred_check_branch
        %260 = sbr.rel (%p257) target = $region36
      $region35: #{tpu_custom_call.1} parent=5 // pred_region
        %s261 = ssub.s32 %s27, 1
        %s262 = sand.u32 %s32, 1
        %s263 = scalar_lea.sflag [#allocation5], %s262
        %s264 = sand.u32 %s40, 1
        %s265 = smul.addr %s264, 8
        %s266 = scalar_lea.vmem [#allocation4], %s265
        // Predicated region
        $region37: #{tpu_custom_call.1} parent=35 // pred_check
          %p267 = pneg %p53
        $region38: #{tpu_custom_call.1} parent=35 // pred_check_branch
          %269 = sbr.rel (%p267) target = $region40
        $region39: #{tpu_custom_call.1} parent=35 // pred_region
          %270 = dma.done %s263, 128
        $region40: #{tpu_custom_call.1} parent=35 // pred_fallthru
          _
        // Predicated region
        $region41: #{tpu_custom_call.1} parent=35 // pred_check
          %p271 = pneg %p74
        $region42: #{tpu_custom_call.1} parent=35 // pred_check_branch
          %273 = sbr.rel (%p271) target = $region44
        $region43: #{tpu_custom_call.1} parent=35 // pred_region
          %274 = dma.done [#allocation8], 128
        $region44: #{tpu_custom_call.1} parent=35 // pred_fallthru
          _
        %s275 = sand.u32 %s32, 1
        %s276 = scalar_lea.sflag [#allocation5], %s275
        %s277 = sand.u32 %s87, 1
        %s278 = smul.addr %s277, 24
        %s279 = scalar_lea.vmem [#allocation9], %s278
        // Predicated region
        $region45: #{tpu_custom_call.1} parent=35 // pred_check
          %p280 = pneg %p100
        $region46: #{tpu_custom_call.1} parent=35 // pred_check_branch
          %282 = sbr.rel (%p280) target = $region48
        $region47: #{tpu_custom_call.1} parent=35 // pred_region
          %283 = dma.done %s276, 384
        $region48: #{tpu_custom_call.1} parent=35 // pred_fallthru
          _
        // Predicated region
        $region49: #{tpu_custom_call.1} parent=35 // pred_check
          %p284 = pneg %p121
        $region50: #{tpu_custom_call.1} parent=35 // pred_check_branch
          %286 = sbr.rel (%p284) target = $region52
        $region51: #{tpu_custom_call.1} parent=35 // pred_region
          %287 = dma.done [#allocation8], 384
        $region52: #{tpu_custom_call.1} parent=35 // pred_fallthru
          _
        %s288 = sand.u32 %s32, 1
        %s289 = scalar_lea.sflag [#allocation5], %s288
        %s290 = sand.u32 %s40, 1
        %s291 = smul.addr %s290, 8
        %s292 = scalar_lea.vmem [#allocation4], %s291
        %p293 = pneg %p53
        %p294 = pneg %p50
        %p295 = pneg %p74
        %p296 = pneg %p71
        %s297 = sand.u32 %s32, 1
        %s298 = scalar_lea.sflag [#allocation5], %s297
        %s299 = sand.u32 %s87, 1
        %s300 = smul.addr %s299, 24
        %s301 = scalar_lea.vmem [#allocation9], %s300
        %p302 = pneg %p100
        %p303 = pneg %p97
        %p304 = pneg %p121
        %p305 = pneg %p118
        %p306 = pneg %p147
        %p307 = pneg %p144
        %s308 = sand.u32 %s134, 1
        %s309 = scalar_lea.sflag [#allocation6], %s308
        %s310 = sand.u32 %s134, 1
        %s311 = scalar_lea.vmem [#allocation11], %s310
        %p312 = pneg %p173
        %p313 = pneg %p170
        %s314 = sand.u32 %s160, 1
        %s315 = scalar_lea.sflag [#allocation13], %s314
        %s316 = sand.u32 %s160, 1
        %s317 = scalar_lea.vmem [#allocation12], %s316
        %v318 = vld [vmem:[%s266] sm:$0xff]
        %v319 = vld [vmem:[#allocation7] sm:$0xff]
        %vm320 = vcmp.ne.f32.partialorder %v319, -1.0
        %vm321 = vcmp.eq.f32.partialorder %v319, 1.0
        %v322 = vmax.f32 %v318, 0.0
        %v323 = vmul.f32 %v318, %v319
        %v324 = vsub.f32 %v322, %v323
        %v325 = vand.u32 2147483647, %v318
        %v326 = vsub.f32 0.0, %v325
        %v327 = vmul.f32 %v326, 1.442695
        %v328 = vpow.pop %v327
        %v329 = vadd.f32 %v328, 1.0
        %v330 = vlog2.pop %v329
        %v331 = vmul.f32 %v330, 0.6931472
        %v332 = vadd.f32 %v324, %v331
        %v333 = vld [vmem:[%s279] sm:$0xff]
        %v334 = vld [vmem:[%s279 + $0x8] sm:$0xff]
        %v335 = vld [vmem:[%s279 + $0x10] sm:$0xff]
        %v336 = vld [vmem:[#allocation10] sm:$0xff]
        %v337 = vld [vmem:[#allocation10 + $0x8] sm:$0xff]
        %v338 = vld [vmem:[#allocation10 + $0x10] sm:$0xff]
        %v339 = vsub.f32 %v333, %v336
        %v340 = vsub.f32 %v334, %v337
        %v341 = vsub.f32 %v335, %v338
        %v342 = vadd.f32 %v339, 1e-06
        %v343 = vadd.f32 %v340, 1e-06
        %v344 = vadd.f32 %v341, 1e-06
        %v345 = vmul.f32 %v342, %v342
        %v346 = vmul.f32 %v343, %v343
        %v347 = vadd.f32 %v345, %v346
        %v348 = vmul.f32 %v344, %v344
        %v349 = vadd.f32 %v347, %v348
        %v350 = vrsqrt.pop %v349
        %v351 = vmul.f32 %v349, %v350
        %vm352 = vcmp.eq.f32.partialorder %v349, inf
        %v353 = vsel %vm352, %v349, %v351
        %vm354 = vcmp.eq.f32.partialorder %v349, 0.0
        %v355 = vand.u32 %v349, 2147483648
        %v356 = vsel %vm354, %v355, %v353
        %v357 = vsel %vm320, %v332, 0.0
        %358 = vadd.xlane.f32.xlu0 %v357
        %v359 = vpop.xlane.xlu0 %358
        %v360 = vrot.slane %v359, 4
        %v361 = vadd.f32 %v359, %v360
        %v362 = vrot.slane %v361, 2
        %v363 = vadd.f32 %v361, %v362
        %v364 = vrot.slane %v363, 1
        %v365 = vadd.f32 %v363, %v364
        %v366 = vsel %vm321, %v356, 0.0
        %367 = vadd.xlane.f32.xlu0 %v366
        %v368 = vpop.xlane.xlu0 %367
        %v369 = vrot.slane %v368, 4
        %v370 = vadd.f32 %v368, %v369
        %v371 = vrot.slane %v370, 2
        %v372 = vadd.f32 %v370, %v371
        %v373 = vrot.slane %v372, 1
        %v374 = vadd.f32 %v372, %v373
        %s375 = sld [smem:[#allocation3]]
        %s376 = scvt.s32.f32 %s375
        %s377 = sld [smem:[#allocation3 + $0x1]]
        %s378 = scvt.s32.f32 %s377
        %v379 = vstv %s376
        %v380 = vrcp.pop %v379
        %v381 = vmul.f32 %v365, %v380
        %382 = vst [vmem:[%s311] sm:$0x1] %v381
        %v383 = vstv %s378
        %v384 = vrcp.pop %v383
        %v385 = vmul.f32 %v374, %v384
        %386 = vst [vmem:[%s317] sm:$0x1] %v385
        %s387 = sand.u32 %s134, 1
        %s388 = scalar_lea.sflag [#allocation6], %s387
        %s389 = sand.u32 %s134, 1
        %s390 = scalar_lea.vmem [#allocation11], %s389
        %s391 = sand.u32 %s160, 1
        %s392 = scalar_lea.sflag [#allocation13], %s391
        %s393 = sand.u32 %s160, 1
        %s394 = scalar_lea.vmem [#allocation12], %s393
        // Predicated region
        $region53: #{tpu_custom_call.1} parent=35 // pred_check
          %p395 = pneg %p144
        $region54: #{tpu_custom_call.1} parent=35 // pred_check_branch
          %397 = sbr.rel (%p395) target = $region56
        $region55: #{tpu_custom_call.1} parent=35 // pred_region
          %s399 = ssub.s32 16, 16
          %400 = vsyncadd %s388, %s399
          %s401 = smul.addr %s32, 16
          %s402 = scalar_lea.hbm %s5, %s401
          %s404 = sshll.u32 %s390, 4
          %s405 = int_to_ptr.vmem [resolvable:$true] %s404
          %407 = dma.vmem_to_hbm [thread:$0]  %s405, 16, %s402, %s388
        $region56: #{tpu_custom_call.1} parent=35 // pred_fallthru
          _
        // Predicated region
        $region57: #{tpu_custom_call.1} parent=35 // pred_check
          %p408 = pneg %p170
        $region58: #{tpu_custom_call.1} parent=35 // pred_check_branch
          %410 = sbr.rel (%p408) target = $region60
        $region59: #{tpu_custom_call.1} parent=35 // pred_region
          %s412 = ssub.s32 16, 16
          %413 = vsyncadd %s392, %s412
          %s414 = smul.addr %s32, 16
          %s415 = scalar_lea.hbm %s6, %s414
          %s417 = sshll.u32 %s394, 4
          %s418 = int_to_ptr.vmem [resolvable:$true] %s417
          %420 = dma.vmem_to_hbm [thread:$0]  %s418, 16, %s415, %s392
        $region60: #{tpu_custom_call.1} parent=35 // pred_fallthru
          _
      $region36: #{tpu_custom_call.1} parent=5 // pred_fallthru
        _
      %p421 = scmp.le.s32.totalorder 2, %s27
      // Predicated region
      $region61: #{tpu_custom_call.1} parent=5 // pred_check
        %p422 = pneg %p421
      $region62: #{tpu_custom_call.1} parent=5 // pred_check_branch
        %424 = sbr.rel (%p422) target = $region64
      $region63: #{tpu_custom_call.1} parent=5 // pred_region
        %s425 = ssub.s32 %s27, 2
        // Predicated region
        $region65: #{tpu_custom_call.1} parent=63 // pred_check
          %p426 = pneg %p150
        $region66: #{tpu_custom_call.1} parent=63 // pred_check_branch
          %428 = sbr.rel (%p426) target = $region68
        $region67: #{tpu_custom_call.1} parent=63 // pred_region
          %s429 = sand.u32 %s135, 1
          %s430 = scalar_lea.sflag [#allocation6], %s429
          %s431 = sand.u32 %s135, 1
          %s432 = scalar_lea.vmem [#allocation11], %s431
          %433 = dma.done %s430, 16
        $region68: #{tpu_custom_call.1} parent=63 // pred_fallthru
          _
        // Predicated region
        $region69: #{tpu_custom_call.1} parent=63 // pred_check
          %p434 = pneg %p176
        $region70: #{tpu_custom_call.1} parent=63 // pred_check_branch
          %436 = sbr.rel (%p434) target = $region72
        $region71: #{tpu_custom_call.1} parent=63 // pred_region
          %s437 = sand.u32 %s161, 1
          %s438 = scalar_lea.sflag [#allocation13], %s437
          %s439 = sand.u32 %s161, 1
          %s440 = scalar_lea.vmem [#allocation12], %s439
          %441 = dma.done %s438, 16
        $region72: #{tpu_custom_call.1} parent=63 // pred_fallthru
          _
      $region64: #{tpu_custom_call.1} parent=5 // pred_fallthru
        _
    $region6: #{tpu_custom_call.1} parent=1 // loop_footer
      %s31 = sadd.s32 1, %s27
    $region7: #{tpu_custom_call.1} parent=1 // loop_footer_branch
      %26 = sbr.rel target = $region3
    $region8: #{tpu_custom_call.1} parent=1 // loop_exit
      _
    %442 = vsyncpa [#allocation5], 1
    %s443 = scalar_lea.sflag [#allocation5], 1
    %444 = vsyncpa %s443, 1
    %445 = vsyncpa [#allocation8], 1
    %446 = vsyncpa [#allocation6], 1
    %s447 = scalar_lea.sflag [#allocation6], 1
    %448 = vsyncpa %s447, 1
    %449 = vsyncpa [#allocation13], 1
    %s450 = scalar_lea.sflag [#allocation13], 1
    %451 = vsyncpa %s450, 1

</llo_original>
